<compile_context>
chip_gen: v7x
topology: tpu7x:2x2x1
jax: 0.10.0
libtpu: 0.0.40
codegen_flags: <defaults>
</compile_context>

<pallas_src>
import numpy as np
import jax
import jax.numpy as jnp
from jax.experimental import pallas as pl
from jax.experimental.pallas import tpu as pltpu

# Module constants from PostProcessor.__init__
CODER_WEIGHTS = (10.0, 10.0, 5.0, 5.0)
NMS_THRESHOLD = 0.6
SCORE_THRESHOLD = 0.3

_LANE = 128   # TPU lane width
_PACK = 256   # pad N to a multiple of this so N/2 stays lane-aligned


# ----------------------------------------------------------------------------
# Pallas kernel: SSD box decode (packed 8-sublane channel-major)
# ----------------------------------------------------------------------------
def _decode_kernel(rel_ref, priors_ref, out_ref):
    """Decode one (batch, prior-tile) block of SSD box regressions.

    Packed channel-major layout: 8 sublanes x T lanes, where the 8 rows are the
    4 coordinates each split into two half-N slabs (row-major reshape of the
    (4, N) channel-major layout).

    rel_ref:    (1, 8, T)  rows: ty_h1, ty_h2, tx_h1, tx_h2, th_h1, th_h2, tw_h1, tw_h2
    priors_ref: (8, Nh)    whole padded prior tensor, VMEM-resident for the launch
    out_ref:    (1, 8, T)  rows: ymin_h1, ymin_h2, xmin_h1, xmin_h2, ymax_*, xmax_*
    """
    tile = out_ref.shape[2]
    off = pl.multiple_of(pl.program_id(1) * tile, _LANE)
    p = priors_ref[:, pl.ds(off, tile)]            # (8, T) slice of resident priors
    r = rel_ref[0]                                 # (8, T)

    mins_a = p[0:4, :]                             # ymin_a, xmin_a halves
    maxs_a = p[4:8, :]                             # ymax_a, xmax_a halves
    center_a = (mins_a + maxs_a) * 0.5             # ycenter_a, xcenter_a halves
    size_a = maxs_a - mins_a                       # ha, wa halves

    # Coder weights (10, 10, 5, 5): rows 0:4 share one scale, rows 4:8 another.
    t_cen = r[0:4, :] * (1.0 / CODER_WEIGHTS[0])   # ty, tx halves
    t_sz = r[4:8, :] * (1.0 / CODER_WEIGHTS[2])    # th, tw halves

    size = jnp.exp(t_sz) * size_a                  # h, w halves (single EUP exp)
    center = t_cen * size_a + center_a             # ycenter, xcenter halves
    half = size * 0.5

    # Direct sub-slice stores (no concatenate / extra slab materialization).
    out_ref[0, 0:4, :] = center - half             # ymin, xmin halves
    out_ref[0, 4:8, :] = center + half             # ymax, xmax halves


def _pick_tile(nh):
    """Largest lane tile: single grid step per batch whenever it fits comfortably."""
    if nh <= 8192:                                 # ~256 KB/block, trivially in VMEM
        return nh
    for t in (8192, 4096, 2048, 1024, 512, 256, 128):
        if nh % t == 0:
            return t
    return nh


def pack_priors(priors):
    """(N, 4) priors -> ((8, N_pad//2) packed channel-major f32, N_pad)."""
    priors = jnp.asarray(priors, jnp.float32)
    n = priors.shape[0]
    n_pad = ((n + _PACK - 1) // _PACK) * _PACK
    if n_pad != n:
        priors = jnp.pad(priors, ((0, n_pad - n), (0, 0)))
    packed = jnp.transpose(priors, (1, 0)).reshape(8, n_pad // 2)
    return packed, n_pad


def decode_boxes_pallas(box_regression, priors_packed):
    """box_regression: (B, N, 4) f32; priors_packed: (8, N_pad//2) f32.

    Returns packed channel-major boxes (B, 8, N_pad//2); a free row-major
    reshape to (B, 4, N_pad) recovers ymin/xmin/ymax/xmax rows.
    """
    assert CODER_WEIGHTS[0] == CODER_WEIGHTS[1] and CODER_WEIGHTS[2] == CODER_WEIGHTS[3]
    B, N, _ = box_regression.shape
    nh = priors_packed.shape[1]
    n_pad = nh * 2
    assert n_pad >= N and n_pad % _PACK == 0

    rel = box_regression.astype(jnp.float32)
    if n_pad != N:
        rel = jnp.pad(rel, ((0, 0), (0, n_pad - N), (0, 0)))
    # Small tensor; XLA fuses the reshape into the transpose. All large
    # transposes (scores / mask / output) have been eliminated.
    rel_packed = jnp.transpose(rel, (0, 2, 1)).reshape(B, 8, nh)

    tile = _pick_tile(nh)
    grid = (B, nh // tile)

    return pl.pallas_call(
        _decode_kernel,
        out_shape=jax.ShapeDtypeStruct((B, 8, nh), jnp.float32),
        grid_spec=pltpu.PrefetchScalarGridSpec(
            num_scalar_prefetch=0,
            grid=grid,
            in_specs=[
                pl.BlockSpec((1, 8, tile), lambda b, n: (b, 0, n)),
                # Whole-array block, constant index -> DMA'd once, stays in VMEM.
                pl.BlockSpec((8, nh), lambda b, n: (0, 0)),
            ],
            out_specs=pl.BlockSpec((1, 8, tile), lambda b, n: (b, 0, n)),
        ),
        compiler_params=pltpu.CompilerParams(
            dimension_semantics=("parallel", "parallel")),
    )(rel_packed, priors_packed)


# ----------------------------------------------------------------------------
# Host-side filtering / NMS (data-dependent shapes -> numpy, mirrors reference)
# ----------------------------------------------------------------------------
def _area_of(left_top, right_bottom):
    hw = np.clip(right_bottom - left_top, a_min=0.0, a_max=None)
    return hw[..., 0] * hw[..., 1]


def _iou_of(boxes0, boxes1, eps=1e-5):
    overlap_lt = np.maximum(boxes0[..., :2], boxes1[..., :2])
    overlap_rb = np.minimum(boxes0[..., 2:], boxes1[..., 2:])
    overlap_area = _area_of(overlap_lt, overlap_rb)
    area0 = _area_of(boxes0[..., :2], boxes0[..., 2:])
    area1 = _area_of(boxes1[..., :2], boxes1[..., 2:])
    return overlap_area / (area0 + area1 - overlap_area + eps)


def _hard_nms(box_probs, iou_threshold):
    if box_probs.shape[0] == 0:
        return box_probs
    scores = box_probs[:, -1]
    boxes = box_probs[:, :4]
    picked = []
    indexes = np.argsort(scores)[::-1]
    while len(indexes) > 0:
        current = indexes[0]
        picked.append(current)
        if len(indexes) == 1:
            break
        current_box = boxes[current]
        indexes = indexes[1:]
        rest = boxes[indexes]
        iou = _iou_of(rest, current_box[None, :])
        indexes = indexes[iou <= iou_threshold]
    return box_probs[np.asarray(picked)]


class PostProcessorPallas:
    """JAX/Pallas re-implementation of PostProcessor.forward."""

    def __init__(self, priors):
        self.priors = jnp.asarray(priors, jnp.float32)                  # (N, 4)
        self.n_orig = int(self.priors.shape[0])
        # Padded + packed ONCE (not a per-call HBM pass).
        self.priors_packed, self.n_pad = pack_priors(self.priors)      # (8, N_pad//2)
        self.nms_threshold = NMS_THRESHOLD
        self.score_threshold = SCORE_THRESHOLD

    def __call__(self, scores, box_regression):
        if box_regression.ndim == 2:
            box_regression = box_regression[None]

        boxes_packed = decode_boxes_pallas(box_regression, self.priors_packed)  # Pallas

        # Overlap the big (B, N, C) scores D2H copy with the decode kernel.
        if hasattr(scores, "copy_to_host_async"):
            scores.copy_to_host_async()

        boxes_np = np.asarray(jax.block_until_ready(boxes_packed))     # (B, 8, Nh)
        B = boxes_np.shape[0]
        # Free row-major views: (B, 8, Nh) -> (B, 4, N_pad); drop padded priors.
        boxes_np = boxes_np.reshape(B, 4, self.n_pad)[:, :, :self.n_orig]
        scores_np = np.asarray(scores)                                  # host anyway (NMS)

        list_boxes, list_labels, list_scores = [], [], []
        for b in range(scores_np.shape[0]):
            # .T on the channel-major slab is a free numpy view.
            bb, bl, bs = self._filter_results(scores_np[b], boxes_np[b].T)
            list_boxes.append(bb)
            list_labels.append(bl.astype(np.int64))
            list_scores.append(bs)
        return [list_boxes, list_labels, list_scores]

    def _filter_results(self, scores, boxes):
        # TODO(synk): greedy NMS and boolean-mask gathers have data-dependent
        # output shapes -> no clean Pallas equivalent; kept on host (numpy),
        # exactly like the reference's .to('cpu') path.  The score-threshold
        # compare is done here too since scores are already on host.
        selected, labels = [], []
        num_classes = scores.shape[1]
        for class_index in range(1, num_classes):
            probs = scores[:, class_index]
            keep = probs > self.score_threshold
            probs = probs[keep]
            subset_boxes = boxes[keep, :]
            box_probs = np.concatenate([subset_boxes, probs.reshape(-1, 1)], axis=1)
            box_probs = _hard_nms(box_probs, self.nms_threshold)
            selected.append(box_probs)
            labels.append(np.full((box_probs.shape[0],), class_index, dtype=np.int64))
        selected = np.concatenate(selected, axis=0)
        labels = np.concatenate(labels, axis=0)
        return selected[:, :4], labels, selected[:, 4]


# ----------------------------------------------------------------------------
# Numpy reference for the decode (correctness check of the Pallas kernel)
# ----------------------------------------------------------------------------
def _decode_reference_np(rel_codes, priors):
    ycenter_a = (priors[:, 0] + priors[:, 2]) / 2
    xcenter_a = (priors[:, 1] + priors[:, 3]) / 2
    ha = priors[:, 2] - priors[:, 0]
    wa = priors[:, 3] - priors[:, 1]
    ty = rel_codes[..., 0] / CODER_WEIGHTS[0]
    tx = rel_codes[..., 1] / CODER_WEIGHTS[1]
    th = rel_codes[..., 2] / CODER_WEIGHTS[2]
    tw = rel_codes[..., 3] / CODER_WEIGHTS[3]
    w = np.exp(tw) * wa
    h = np.exp(th) * ha
    ycenter = ty * ha + ycenter_a
    xcenter = tx * wa + xcenter_a
    return np.stack(
        [ycenter - h / 2.0, xcenter - w / 2.0, ycenter + h / 2.0, xcenter + w / 2.0],
        axis=-1,
    )


if __name__ == "__main__":
    # Small synthetic shapes consistent with SSD post-processing:
    # B batches, N priors (deliberately NOT a multiple of 256 to exercise the
    # padding path), C classes (class 0 = background).
    B, N, C = 2, 1000, 8

    key = jax.random.PRNGKey(0)
    k1, k2, k3, k4, k5 = jax.random.split(key, 5)

    # Deterministic synthetic priors in (ymin, xmin, ymax, xmax), normalized coords.
    cy = jax.random.uniform(k1, (N, 1), minval=0.1, maxval=0.9)
    cx = jax.random.uniform(k2, (N, 1), minval=0.1, maxval=0.9)
    wh = jax.random.uniform(k3, (N, 2), minval=0.05, maxval=0.2)
    priors = jnp.concatenate(
        [cy - wh[:, :1] / 2, cx - wh[:, 1:] / 2, cy + wh[:, :1] / 2, cx + wh[:, 1:] / 2],
        axis=1,
    ).astype(jnp.float32)

    scores = jax.random.uniform(k4, (B, N, C), dtype=jnp.float32)
    box_regression = 0.5 * jax.random.normal(k5, (B, N, 4), dtype=jnp.float32)

    # Check the Pallas decode against the numpy reference.
    priors_packed, n_pad = pack_priors(priors)
    dec_packed = jax.block_until_ready(decode_boxes_pallas(box_regression, priors_packed))
    dec = np.asarray(dec_packed).reshape(B, 4, n_pad)[:, :, :N]
    dec = np.transpose(dec, (0, 2, 1))
    ref = _decode_reference_np(np.asarray(box_regression), np.asarray(priors))
    assert np.allclose(dec, ref, rtol=1e-5, atol=1e-5), "decode mismatch"

    # Full post-processing forward.
    post = PostProcessorPallas(priors)
    out_boxes, out_labels, out_scores = post(scores, box_regression)
    assert len(out_boxes) == B and len(out_labels) == B and len(out_scores) == B
    for b in range(B):
        assert out_boxes[b].shape[1] == 4
        assert out_boxes[b].shape[0] == out_labels[b].shape[0] == out_scores[b].shape[0]

    print("KERNEL_OK")
</pallas_src>

<mosaic_0001>
module attributes {stable_mosaic.version = 11 : i64} {
  func.func @_decode_kernel(%arg0: i32, %arg1: i32, %arg2: memref<1x8x512xf32, #tpu.memory_space<vmem>>, %arg3: memref<8x512xf32, #tpu.memory_space<vmem>>, %arg4: memref<1x8x512xf32, #tpu.memory_space<vmem>>) attributes {dimension_semantics = [#tpu.dimension_semantics<parallel>, #tpu.dimension_semantics<parallel>], iteration_bounds = array<i64: 2, 1>, scalar_prefetch = 0 : i64, scratch_operands = 0 : i64, tpu.core_type = #tpu.core_type<tc>, window_params = [{transform_indices = @transform_0, window_bounds = array<i64: 1, 8, 512>}, {pipeline_mode = #tpu.pipeline_mode<synchronous>, transform_indices = @transform_1, window_bounds = array<i64: 8, 512>}, {transform_indices = @transform_2, window_bounds = array<i64: 1, 8, 512>}]} {
    %c512_i32 = arith.constant 512 : i32
    %0 = arith.muli %arg1, %c512_i32 : i32
    %1 = tpu.assume_multiple %0, 128 : i32
    %c0 = arith.constant 0 : index
    %2 = arith.index_cast %1 : i32 to index
    %3 = vector.load %arg3[%c0, %2] : memref<8x512xf32, #tpu.memory_space<vmem>>, vector<8x512xf32>
    %c0_0 = arith.constant 0 : index
    %c0_1 = arith.constant 0 : index
    %c0_2 = arith.constant 0 : index
    %4 = vector.load %arg2[%c0_0, %c0_1, %c0_2] : memref<1x8x512xf32, #tpu.memory_space<vmem>>, vector<1x8x512xf32>
    %5 = vector.shape_cast %4 : vector<1x8x512xf32> to vector<8x512xf32>
    %6 = vector.extract_strided_slice %3 {offsets = [0, 0], sizes = [4, 512], strides = [1, 1]} : vector<8x512xf32> to vector<4x512xf32>
    %7 = vector.extract_strided_slice %3 {offsets = [4, 0], sizes = [4, 512], strides = [1, 1]} : vector<8x512xf32> to vector<4x512xf32>
    %8 = arith.addf %6, %7 : vector<4x512xf32>
    %cst = arith.constant 5.000000e-01 : f32
    %9 = vector.broadcast %cst : f32 to vector<4x512xf32>
    %10 = arith.mulf %8, %9 : vector<4x512xf32>
    %11 = arith.subf %7, %6 : vector<4x512xf32>
    %12 = vector.extract_strided_slice %5 {offsets = [0, 0], sizes = [4, 512], strides = [1, 1]} : vector<8x512xf32> to vector<4x512xf32>
    %cst_3 = arith.constant 1.000000e-01 : f32
    %13 = vector.broadcast %cst_3 : f32 to vector<4x512xf32>
    %14 = arith.mulf %12, %13 : vector<4x512xf32>
    %15 = vector.extract_strided_slice %5 {offsets = [4, 0], sizes = [4, 512], strides = [1, 1]} : vector<8x512xf32> to vector<4x512xf32>
    %cst_4 = arith.constant 2.000000e-01 : f32
    %16 = vector.broadcast %cst_4 : f32 to vector<4x512xf32>
    %17 = arith.mulf %15, %16 : vector<4x512xf32>
    %18 = math.exp %17 : vector<4x512xf32>
    %19 = arith.mulf %18, %11 : vector<4x512xf32>
    %20 = arith.mulf %14, %11 : vector<4x512xf32>
    %21 = arith.addf %20, %10 : vector<4x512xf32>
    %cst_5 = arith.constant 5.000000e-01 : f32
    %22 = vector.broadcast %cst_5 : f32 to vector<4x512xf32>
    %23 = arith.mulf %19, %22 : vector<4x512xf32>
    %24 = arith.subf %21, %23 : vector<4x512xf32>
    %c0_6 = arith.constant 0 : index
    %c0_7 = arith.constant 0 : index
    %c0_8 = arith.constant 0 : index
    %25 = vector.load %arg4[%c0_6, %c0_7, %c0_8] : memref<1x8x512xf32, #tpu.memory_space<vmem>>, vector<1x4x512xf32>
    %26 = vector.shape_cast %25 : vector<1x4x512xf32> to vector<4x512xf32>
    %27 = vector.shape_cast %24 : vector<4x512xf32> to vector<1x4x512xf32>
    tpu.vector_store %arg4[%c0_6, %c0_7, %c0_8], %27 {strides = array<i32>} : memref<1x8x512xf32, #tpu.memory_space<vmem>>, vector<1x4x512xf32>,
    %28 = arith.addf %21, %23 : vector<4x512xf32>
    %c0_9 = arith.constant 0 : index
    %c4 = arith.constant 4 : index
    %c0_10 = arith.constant 0 : index
    %29 = vector.load %arg4[%c0_9, %c4, %c0_10] : memref<1x8x512xf32, #tpu.memory_space<vmem>>, vector<1x4x512xf32>
    %30 = vector.shape_cast %29 : vector<1x4x512xf32> to vector<4x512xf32>
    %31 = vector.shape_cast %28 : vector<4x512xf32> to vector<1x4x512xf32>
    tpu.vector_store %arg4[%c0_9, %c4, %c0_10], %31 {strides = array<i32>} : memref<1x8x512xf32, #tpu.memory_space<vmem>>, vector<1x4x512xf32>,
    return
  }
  func.func @transform_0(%arg0: i32, %arg1: i32) -> (i32, i32, i32) {
    %c0_i32 = arith.constant 0 : i32
    %c0_i32_0 = arith.constant 0 : i32
    return %arg0, %c0_i32, %arg1 : i32, i32, i32
  }
  func.func @transform_1(%arg0: i32, %arg1: i32) -> (i32, i32) {
    %c0_i32 = arith.constant 0 : i32
    %c0_i32_0 = arith.constant 0 : i32
    %c0_i32_1 = arith.constant 0 : i32
    return %c0_i32, %c0_i32_0 : i32, i32
  }
  func.func @transform_2(%arg0: i32, %arg1: i32) -> (i32, i32, i32) {
    %c0_i32 = arith.constant 0 : i32
    %c0_i32_0 = arith.constant 0 : i32
    return %arg0, %c0_i32, %arg1 : i32, i32, i32
  }
}

</mosaic_0001>

<llo_original>
// kernel: tpu_custom_call.1
$region0: #{tpu_custom_call.1}
  #allocation0 [shape = 'u32[]', space=smem, size = 0x4, offset = 0x4, fixed_abs, tag = 'smem constant byte address 0x4 - core index']
  #allocation1 [shape = 'u32[144,128]{1,0:T(1,128)}', space=vmem, size = 0x12000, scoped, tag = 'internal scratch']
  %s0 = inlined_call_operand.hbm [shape: f32[2,8,512], index: 0, kind: input, shape index: {}]
  %s1 = inlined_call_operand.hbm [shape: f32[8,512], index: 1, kind: input, shape index: {}]
  %s2 = inlined_call_operand.hbm [shape: f32[2,8,512], index: 2, kind: output, shape index: {}]
  %s3 = sld [smem:[#allocation0]]
  $region49: #{tpu_custom_call.1} parent=0
    _
  %s5 = ssub.s32 1, %s3
  %s6 = scalar_select 0, %s5, %s3
  $region1: #{tpu_custom_call.1} parent=0
    #allocation2 [shape = 'u8[32768]{0}', space=vmem, size = 0x8000, scoped, tag = 'input window, operand 0']
    #allocation3 [shape = 's32[2]{0}', space=sflag, size = 0x8, scoped, tag = 'scoped memory for tpu_custom_call.1']
    #allocation4 [shape = 's32[2]{0}', space=sflag, size = 0x8, scoped, tag = 'scoped memory for tpu_custom_call.1']
    #allocation5 [shape = 'u8[16384]{0}', space=vmem, size = 0x4000, scoped, tag = 'input window, operand 1, single buffered']
    #allocation6 [shape = 's32[1]{0}', space=sflag, size = 0x4, scoped, tag = 'scoped memory for tpu_custom_call.1']
    #allocation7 [shape = 'u8[32768]{0}', space=vmem, size = 0x8000, scoped, tag = 'output window, operand 0']
    %7 = vsyncpa [#allocation3], 0
    %s8 = scalar_lea.sflag [#allocation3], 1
    %9 = vsyncpa %s8, 0
    %10 = vsyncpa [#allocation6], 0
    %11 = vsyncpa [#allocation4], 0
    %s12 = scalar_lea.sflag [#allocation4], 1
    %13 = vsyncpa %s12, 0
    loop: start=0, step=1, limit=4
    $region2: #{tpu_custom_call.1} parent=1 // loop_pre_header
      _
    $region3: #{tpu_custom_call.1} parent=1 // loop_header
      %s15 = sphi 0, %s19
      %p16 = scmp.ge.s32.totalorder %s15, 4
      %s22 = sphi 0, %s34
      %s23 = sphi 0, %s30
      %s24 = sphi 0, %s22
      %s25 = sphi 0, %s23
      %s26 = sphi 0, %s24
      %s27 = sphi 0, %s25
      %s39 = sphi 0, %s41
      %s42 = sphi 0, %s39
      %s43 = sphi 0, %s42
      %s59 = sphi 0, %s43
      %s63 = sphi 0, %s63
      %s65 = sphi 0, %s63
      %s66 = sphi 0, %s65
      %s80 = sphi 0, %s66
      %s88 = sphi 0, %s90
      %s91 = sphi 0, %s88
      %s92 = sphi 0, %s91
      %s108 = sphi 0, %s92
    $region4: #{tpu_custom_call.1} parent=1 // loop_header_branch
      %18 = sbr.rel (%p16) target = $region8
    $region5: #{tpu_custom_call.1} parent=1 // loop_body
      %s20 = ssub.s32 %s15, 1
      %s21 = ssub.s32 %s15, 2
      %s28 = sadd.s32 1, %s23
      %p29 = scmp.ge.s32.totalorder %s28, 1
      %s30 = scalar_select %p29, 0, %s28
      %s31 = sadd.s32 1, %s22
      %s32 = scalar_select %p29, %s31, %s22
      %p33 = scmp.ge.s32.totalorder %s32, 2
      %s34 = scalar_select %p33, 0, %s32
      %s35 = ssub.s32 %s22, %s34
      %s36 = ssub.s32 %s23, %s30
      %s37 = sor.u32 %s35, %s36
      %p38 = scmp.eq.s32.totalorder %s37, 0
      %s40 = sadd.s32 %s39, 1
      %s41 = scalar_select %p38, %s39, %s40
      %p44 = pneg %p38
      %p45 = scmp.eq.s32.totalorder %s15, 1
      %p46 = por %p44, %p45
      %p47 = scmp.ne.s32.totalorder %s39, %s42
      %p48 = scmp.eq.s32.totalorder %s15, 0
      %p49 = por %p47, %p48
      %p50 = scmp.ne.s32.totalorder %s39, %s42
      %p51 = scmp.eq.s32.totalorder %s20, 1
      %p52 = por %p50, %p51
      %p53 = scmp.ne.s32.totalorder %s42, %s43
      %p54 = scmp.eq.s32.totalorder %s20, 0
      %p55 = por %p53, %p54
      %p56 = scmp.ne.s32.totalorder %s42, %s43
      %p57 = scmp.eq.s32.totalorder %s21, 1
      %p58 = por %p56, %p57
      %p60 = scmp.ne.s32.totalorder %s43, %s59
      %p61 = scmp.eq.s32.totalorder %s21, 0
      %p62 = por %p60, %p61
      %s64 = sadd.s32 %s63, 1
      %p67 = scmp.eq.s32.totalorder %s15, 1
      %p68 = scmp.ne.s32.totalorder %s63, %s65
      %p69 = scmp.eq.s32.totalorder %s15, 0
      %p70 = por %p68, %p69
      %p71 = scmp.ne.s32.totalorder %s63, %s65
      %p72 = scmp.eq.s32.totalorder %s20, 1
      %p73 = por %p71, %p72
      %p74 = scmp.ne.s32.totalorder %s65, %s66
      %p75 = scmp.eq.s32.totalorder %s20, 0
      %p76 = por %p74, %p75
      %p77 = scmp.ne.s32.totalorder %s65, %s66
      %p78 = scmp.eq.s32.totalorder %s21, 1
      %p79 = por %p77, %p78
      %p81 = scmp.ne.s32.totalorder %s66, %s80
      %p82 = scmp.eq.s32.totalorder %s21, 0
      %p83 = por %p81, %p82
      %s84 = ssub.s32 %s22, %s34
      %s85 = ssub.s32 %s23, %s30
      %s86 = sor.u32 %s84, %s85
      %p87 = scmp.eq.s32.totalorder %s86, 0
      %s89 = sadd.s32 %s88, 1
      %s90 = scalar_select %p87, %s88, %s89
      %p93 = pneg %p87
      %p94 = scmp.eq.s32.totalorder %s15, 1
      %p95 = por %p93, %p94
      %p96 = scmp.ne.s32.totalorder %s88, %s91
      %p97 = scmp.eq.s32.totalorder %s15, 0
      %p98 = por %p96, %p97
      %p99 = scmp.ne.s32.totalorder %s88, %s91
      %p100 = scmp.eq.s32.totalorder %s20, 1
      %p101 = por %p99, %p100
      %p102 = scmp.ne.s32.totalorder %s91, %s92
      %p103 = scmp.eq.s32.totalorder %s20, 0
      %p104 = por %p102, %p103
      %p105 = scmp.ne.s32.totalorder %s91, %s92
      %p106 = scmp.eq.s32.totalorder %s21, 1
      %p107 = por %p105, %p106
      %p109 = scmp.ne.s32.totalorder %s92, %s108
      %p110 = scmp.eq.s32.totalorder %s21, 0
      %p111 = por %p109, %p110
      %p112 = scmp.le.s32.totalorder 1, %s15
      %p113 = scmp.lt.s32.totalorder %s15, 3
      %p114 = pnand %p112, %p113
      %p115 = pneg %p114
      // Predicated region
      $region9: #{tpu_custom_call.1} parent=5 // pred_check
        _
      $region10: #{tpu_custom_call.1} parent=5 // pred_check_branch
        %117 = sbr.rel (%p114) target = $region12
      $region11: #{tpu_custom_call.1} parent=5 // pred_region
        %s118 = ssub.s32 %s15, 1
        // Predicated region
        $region13: #{tpu_custom_call.1} parent=11 // pred_check
          %p119 = pneg %p76
        $region14: #{tpu_custom_call.1} parent=11 // pred_check_branch
          %121 = sbr.rel (%p119) target = $region16
        $region15: #{tpu_custom_call.1} parent=11 // pred_region
          %s123 = ssub.s32 512, 512
          %124 = vsyncadd [#allocation6], %s123
          %s126 = sshll.u32 [#allocation5], 4
          %s127 = int_to_ptr.vmem [resolvable:$true] %s126
          %129 = dma.hbm_to_vmem [thread:$0]  %s1, 512, %s127, [#allocation6]
        $region16: #{tpu_custom_call.1} parent=11 // pred_fallthru
          _
      $region12: #{tpu_custom_call.1} parent=5 // pred_fallthru
        _
      %p130 = scmp.lt.s32.totalorder %s15, 2
      // Predicated region
      $region17: #{tpu_custom_call.1} parent=5 // pred_check
        %p131 = pneg %p130
      $region18: #{tpu_custom_call.1} parent=5 // pred_check_branch
        %133 = sbr.rel (%p131) target = $region20
      $region19: #{tpu_custom_call.1} parent=5 // pred_region
        // Predicated region
        $region21: #{tpu_custom_call.1} parent=19 // pred_check
          %p134 = pneg %p49
        $region22: #{tpu_custom_call.1} parent=19 // pred_check_branch
          %136 = sbr.rel (%p134) target = $region24
        $region23: #{tpu_custom_call.1} parent=19 // pred_region
          %s137 = sand.u32 %s39, 1
          %s138 = scalar_lea.sflag [#allocation3], %s137
          %s139 = sand.u32 %s39, 1
          %s140 = smul.addr %s139, 32
          %s141 = scalar_lea.vmem [#allocation2], %s140
          %s142 = smul.u32 4, %s23
          %s144 = ssub.s32 512, 512
          %145 = vsyncadd %s138, %s144
          %s146 = smul.addr %s22, 4
          %s147 = sadd.s32 %s142, %s146
          %s148 = smul.addr %s147, 128
          %s149 = scalar_lea.hbm %s0, %s148
          %s151 = sshll.u32 %s141, 4
          %s152 = int_to_ptr.vmem [resolvable:$true] %s151
          %154 = dma.hbm_to_vmem [thread:$0]  %s149, 512, %s152, %s138
        $region24: #{tpu_custom_call.1} parent=19 // pred_fallthru
          _
      $region20: #{tpu_custom_call.1} parent=5 // pred_fallthru
        _
      %p155 = scmp.le.s32.totalorder 1, %s15
      %p156 = scmp.lt.s32.totalorder %s15, 3
      %p157 = pnand %p155, %p156
      %p158 = pneg %p157
      // Predicated region
      $region25: #{tpu_custom_call.1} parent=5 // pred_check
        _
      $region26: #{tpu_custom_call.1} parent=5 // pred_check_branch
        %160 = sbr.rel (%p157) target = $region28
      $region27: #{tpu_custom_call.1} parent=5 // pred_region
        %s161 = ssub.s32 %s15, 1
        %s162 = sand.u32 %s42, 1
        %s163 = scalar_lea.sflag [#allocation3], %s162
        %s164 = sand.u32 %s42, 1
        %s165 = smul.addr %s164, 32
        %s166 = scalar_lea.vmem [#allocation2], %s165
        // Predicated region
        $region29: #{tpu_custom_call.1} parent=27 // pred_check
          %p167 = pneg %p55
        $region30: #{tpu_custom_call.1} parent=27 // pred_check_branch
          %169 = sbr.rel (%p167) target = $region32
        $region31: #{tpu_custom_call.1} parent=27 // pred_region
          %170 = dma.done %s163, 512
        $region32: #{tpu_custom_call.1} parent=27 // pred_fallthru
          _
        // Predicated region
        $region33: #{tpu_custom_call.1} parent=27 // pred_check
          %p171 = pneg %p76
        $region34: #{tpu_custom_call.1} parent=27 // pred_check_branch
          %173 = sbr.rel (%p171) target = $region36
        $region35: #{tpu_custom_call.1} parent=27 // pred_region
          %174 = dma.done [#allocation6], 512
        $region36: #{tpu_custom_call.1} parent=27 // pred_fallthru
          _
        %s175 = sand.u32 %s42, 1
        %s176 = scalar_lea.sflag [#allocation3], %s175
        %s177 = sand.u32 %s42, 1
        %s178 = smul.addr %s177, 32
        %s179 = scalar_lea.vmem [#allocation2], %s178
        %p180 = pneg %p55
        %p181 = pneg %p52
        %p182 = pneg %p76
        %p183 = pneg %p73
        %p184 = pneg %p104
        %p185 = pneg %p101
        %s186 = sand.u32 %s91, 1
        %s187 = scalar_lea.sflag [#allocation4], %s186
        %s188 = sand.u32 %s91, 1
        %s189 = smul.addr %s188, 32
        %s190 = scalar_lea.vmem [#allocation7], %s189
        %s191 = smul.u32 4, %s25
        %s192 = smul.u32 4, %s25
        %s193 = smul.u32 %s25, 512
        %s194 = sshra.s32 %s193, 7
        %s195 = sand.u32 %s193, 127
        %s196 = smul.addr %s194, 8
        %s197 = scalar_lea.vmem [#allocation5], %s196
        %v198 = vld [vmem:[%s197] sm:$0xff]
        %v199 = vld [vmem:[%s197 + $0x8] sm:$0xff]
        %v200 = vld [vmem:[%s197 + $0x10] sm:$0xff]
        %v201 = vld [vmem:[%s197 + $0x18] sm:$0xff]
        %v202 = vld [vmem:[%s166] sm:$0xff]
        %v203 = vld [vmem:[%s166 + $0x8] sm:$0xff]
        %v204 = vld [vmem:[%s166 + $0x10] sm:$0xff]
        %v205 = vld [vmem:[%s166 + $0x18] sm:$0xff]
        %v210 = vrot.slane %v198, 4
        %v211 = vrot.slane %v199, 4
        %v212 = vrot.slane %v200, 4
        %v213 = vrot.slane %v201, 4
        %v218 = vadd.f32 %v198, %v210
        %v219 = vadd.f32 %v199, %v211
        %v220 = vadd.f32 %v200, %v212
        %v221 = vadd.f32 %v201, %v213
        %v222 = vmul.f32 %v218, 0.5
        %v223 = vmul.f32 %v219, 0.5
        %v224 = vmul.f32 %v220, 0.5
        %v225 = vmul.f32 %v221, 0.5
        %v226 = vsub.f32 %v198, %v210
        %v227 = vsub.f32 %v199, %v211
        %v228 = vsub.f32 %v200, %v212
        %v229 = vsub.f32 %v201, %v213
        %v230 = vmul.f32 %v202, 0.1
        %v231 = vmul.f32 %v203, 0.1
        %v232 = vmul.f32 %v204, 0.1
        %v233 = vmul.f32 %v205, 0.1
        %v234 = vmul.f32 %v202, 0.2
        %v235 = vmul.f32 %v203, 0.2
        %v236 = vmul.f32 %v204, 0.2
        %v237 = vmul.f32 %v205, 0.2
        %v238 = vmul.f32 %v234, 1.442695
        %v239 = vpow.pop %v238
        %v240 = vmul.f32 %v235, 1.442695
        %v241 = vpow.pop %v240
        %v242 = vmul.f32 %v236, 1.442695
        %v243 = vpow.pop %v242
        %v244 = vmul.f32 %v237, 1.442695
        %v245 = vpow.pop %v244
        %v246 = vmul.f32 %v239, %v226
        %v247 = vmul.f32 %v241, %v227
        %v248 = vmul.f32 %v243, %v228
        %v249 = vmul.f32 %v245, %v229
        %v254 = vrot.slane %v226, 4
        %v255 = vrot.slane %v227, 4
        %v256 = vrot.slane %v228, 4
        %v257 = vrot.slane %v229, 4
        %v262 = vmul.f32 %v230, %v254
        %v263 = vmul.f32 %v231, %v255
        %v264 = vmul.f32 %v232, %v256
        %v265 = vmul.f32 %v233, %v257
        %v266 = vadd.f32 %v262, %v222
        %v267 = vadd.f32 %v263, %v223
        %v268 = vadd.f32 %v264, %v224
        %v269 = vadd.f32 %v265, %v225
        %v270 = vmul.f32 %v246, 0.5
        %v271 = vmul.f32 %v247, 0.5
        %v272 = vmul.f32 %v248, 0.5
        %v273 = vmul.f32 %v249, 0.5
        %v278 = vrot.slane %v270, 4
        %v279 = vrot.slane %v271, 4
        %v280 = vrot.slane %v272, 4
        %v281 = vrot.slane %v273, 4
        %v286 = vsub.f32 %v266, %v278
        %v287 = vsub.f32 %v267, %v279
        %v288 = vsub.f32 %v268, %v280
        %v289 = vsub.f32 %v269, %v281
        %290 = vst [vmem:[%s190] sm:$0xf] %v286
        %291 = vst [vmem:[%s190 + $0x8] sm:$0xf] %v287
        %292 = vst [vmem:[%s190 + $0x10] sm:$0xf] %v288
        %293 = vst [vmem:[%s190 + $0x18] sm:$0xf] %v289
        %v294 = vadd.f32 %v266, %v278
        %v295 = vadd.f32 %v267, %v279
        %v296 = vadd.f32 %v268, %v280
        %v297 = vadd.f32 %v269, %v281
        %v302 = vrot.slane %v294, 4
        %v303 = vrot.slane %v295, 4
        %v304 = vrot.slane %v296, 4
        %v305 = vrot.slane %v297, 4
        %310 = vst [vmem:[%s190] sm:$0xf0] %v302
        %311 = vst [vmem:[%s190 + $0x8] sm:$0xf0] %v303
        %312 = vst [vmem:[%s190 + $0x10] sm:$0xf0] %v304
        %313 = vst [vmem:[%s190 + $0x18] sm:$0xf0] %v305
        %s314 = sand.u32 %s91, 1
        %s315 = scalar_lea.sflag [#allocation4], %s314
        %s316 = sand.u32 %s91, 1
        %s317 = smul.addr %s316, 32
        %s318 = scalar_lea.vmem [#allocation7], %s317
        // Predicated region
        $region37: #{tpu_custom_call.1} parent=27 // pred_check
          %p319 = pneg %p101
        $region38: #{tpu_custom_call.1} parent=27 // pred_check_branch
          %321 = sbr.rel (%p319) target = $region40
        $region39: #{tpu_custom_call.1} parent=27 // pred_region
          %s322 = smul.u32 4, %s25
          %s324 = ssub.s32 512, 512
          %325 = vsyncadd %s315, %s324
          %s326 = smul.addr %s24, 4
          %s327 = sadd.s32 %s322, %s326
          %s328 = smul.addr %s327, 128
          %s329 = scalar_lea.hbm %s2, %s328
          %s331 = sshll.u32 %s318, 4
          %s332 = int_to_ptr.vmem [resolvable:$true] %s331
          %334 = dma.vmem_to_hbm [thread:$0]  %s332, 512, %s329, %s315
        $region40: #{tpu_custom_call.1} parent=27 // pred_fallthru
          _
      $region28: #{tpu_custom_call.1} parent=5 // pred_fallthru
        _
      %p335 = scmp.le.s32.totalorder 2, %s15
      // Predicated region
      $region41: #{tpu_custom_call.1} parent=5 // pred_check
        %p336 = pneg %p335
      $region42: #{tpu_custom_call.1} parent=5 // pred_check_branch
        %338 = sbr.rel (%p336) target = $region44
      $region43: #{tpu_custom_call.1} parent=5 // pred_region
        %s339 = ssub.s32 %s15, 2
        // Predicated region
        $region45: #{tpu_custom_call.1} parent=43 // pred_check
          %p340 = pneg %p107
        $region46: #{tpu_custom_call.1} parent=43 // pred_check_branch
          %342 = sbr.rel (%p340) target = $region48
        $region47: #{tpu_custom_call.1} parent=43 // pred_region
          %s343 = sand.u32 %s92, 1
          %s344 = scalar_lea.sflag [#allocation4], %s343
          %s345 = sand.u32 %s92, 1
          %s346 = smul.addr %s345, 32
          %s347 = scalar_lea.vmem [#allocation7], %s346
          %348 = dma.done %s344, 512
        $region48: #{tpu_custom_call.1} parent=43 // pred_fallthru
          _
      $region44: #{tpu_custom_call.1} parent=5 // pred_fallthru
        _
    $region6: #{tpu_custom_call.1} parent=1 // loop_footer
      %s19 = sadd.s32 1, %s15
    $region7: #{tpu_custom_call.1} parent=1 // loop_footer_branch
      %14 = sbr.rel target = $region3
    $region8: #{tpu_custom_call.1} parent=1 // loop_exit
      _
    %349 = vsyncpa [#allocation3], 1
    %s350 = scalar_lea.sflag [#allocation3], 1
    %351 = vsyncpa %s350, 1
    %352 = vsyncpa [#allocation6], 1
    %353 = vsyncpa [#allocation4], 1
    %s354 = scalar_lea.sflag [#allocation4], 1
    %355 = vsyncpa %s354, 1

</llo_original>
